<compile_context>
chip_gen: v5e
topology: v5e:2x2
jax: 0.10.0
libtpu: 0.0.40
codegen_flags: <defaults>
</compile_context>

<pallas_src>
import jax
import jax.numpy as jnp
from jax.experimental import pallas as pl
from jax.experimental.pallas import tpu as pltpu

IN_DIM = 768
HID_DIM = 128
OUT_DIM = 1

# 2048 amortizes per-step overhead to <10% on v6e/v7x and stays VMEM-safe on
# all generations with vmem_limit_bytes=32 MiB (f32 x double buffer ~12.6 MiB).
# v7x can profitably go to 4096 via the tile_b argument.
DEFAULT_TILE_B = 2048


def _round_up(n, m):
    return (n + m - 1) // m * m


def mlp_kernel(x_ref, w1_ref, b1_ref, w2_ref, b2_ref, o_ref):
    # Cast to bf16 in-kernel (input stream stays f32 in HBM: 4 B/elt, no
    # separate cast kernel).  MXU matmul with f32 accumulation.
    x_bf = x_ref[...].astype(jnp.bfloat16)
    h = jnp.dot(x_bf, w1_ref[...], preferred_element_type=jnp.float32)
    # Bias + ReLU on the VPU in f32.
    h = jnp.maximum(h + b1_ref[...], 0.0)
    # Second linear (128 -> 1): N=1 matmul done as VPU multiply + lane reduce.
    # w2_ref is the (1, 128) row view of the (128, 1) weight; b2 is an SMEM scalar.
    logits = jnp.sum(h * w2_ref[...], axis=-1, keepdims=True) + b2_ref[0, 0]
    o_ref[...] = jax.nn.sigmoid(logits).astype(o_ref.dtype)


def outlier_detection_forward(x, w1, b1, w2, b2, *, tile_b=DEFAULT_TILE_B):
    """x: (B, 768) float32 -> (B, 1) float32 in [0, 1]."""
    B = x.shape[0]

    # Tile size: multiple of 8 (sublane).  Cap at ~B/2 so the grid has >= 2
    # steps when possible (v7x megacore load balance); no padding of x — the
    # partial last block is masked by Pallas.
    half = max(8, _round_up(pl.cdiv(B, 2), 8))
    tb = max(8, _round_up(min(tile_b, half), 8))

    grid = (pl.cdiv(B, tb),)

    # Weights/biases are tiny: one-time casts/reshapes, resident in VMEM.
    w1_bf = w1.astype(jnp.bfloat16)
    b1_row = b1.reshape(1, HID_DIM).astype(jnp.float32)
    w2_row = w2.reshape(1, HID_DIM).astype(jnp.float32)
    b2_s = b2.reshape(1, 1).astype(jnp.float32)

    out = pl.pallas_call(
        mlp_kernel,
        out_shape=jax.ShapeDtypeStruct((B, OUT_DIM), jnp.float32),
        grid_spec=pltpu.PrefetchScalarGridSpec(
            num_scalar_prefetch=0,
            grid=grid,
            in_specs=[
                # Streamed f32 batch tile (cast to bf16 inside the kernel).
                pl.BlockSpec((tb, IN_DIM), lambda i: (i, 0)),
                # Weights / biases: constant block index -> resident in VMEM.
                pl.BlockSpec((IN_DIM, HID_DIM), lambda i: (0, 0)),
                pl.BlockSpec((1, HID_DIM), lambda i: (0, 0)),
                pl.BlockSpec((1, HID_DIM), lambda i: (0, 0)),
                # Scalar bias of the output head lives in SMEM.
                pl.BlockSpec(memory_space=pltpu.MemorySpace.SMEM),
            ],
            out_specs=pl.BlockSpec((tb, OUT_DIM), lambda i: (i, 0)),
        ),
        compiler_params=pltpu.CompilerParams(
            dimension_semantics=("parallel",),
            vmem_limit_bytes=32 << 20,
        ),
    )(x, w1_bf, b1_row, w2_row, b2_s)

    return out


def init_params(key):
    """Deterministic init matching the PyTorch module's __init__ semantics:
    kaiming_normal_ on weights (fan_in = in_features, gain = sqrt(2)),
    default nn.Linear uniform init on biases."""
    k1, k2, k3, k4 = jax.random.split(key, 4)
    w1 = jax.random.normal(k1, (IN_DIM, HID_DIM), jnp.float32) * jnp.sqrt(2.0 / IN_DIM)
    w2 = jax.random.normal(k2, (HID_DIM, OUT_DIM), jnp.float32) * jnp.sqrt(2.0 / HID_DIM)
    b1 = jax.random.uniform(
        k3, (1, HID_DIM), jnp.float32,
        minval=-1.0 / jnp.sqrt(IN_DIM), maxval=1.0 / jnp.sqrt(IN_DIM))
    b2 = jax.random.uniform(
        k4, (1, OUT_DIM), jnp.float32,
        minval=-1.0 / jnp.sqrt(HID_DIM), maxval=1.0 / jnp.sqrt(HID_DIM))
    return w1, b1, w2, b2


def _reference(x, w1, b1, w2, b2, *, bf16_inputs=True):
    if bf16_inputs:
        x = x.astype(jnp.bfloat16).astype(jnp.float32)
        w1 = w1.astype(jnp.bfloat16).astype(jnp.float32)
    h = jnp.maximum(x @ w1 + b1.reshape(1, HID_DIM), 0.0)
    return jax.nn.sigmoid(h @ w2.reshape(HID_DIM, OUT_DIM) + b2.reshape(1, OUT_DIM))


if __name__ == "__main__":
    key = jax.random.PRNGKey(0)
    kx, kp, kx2 = jax.random.split(key, 3)

    w1, b1, w2, b2 = init_params(kp)

    # Small check (grid of 2 tiny tiles).
    B = 16
    x = jax.random.normal(kx, (B, IN_DIM), jnp.float32)
    out = jax.block_until_ready(outlier_detection_forward(x, w1, b1, w2, b2))
    assert out.shape == (B, OUT_DIM)
    ref_bf = _reference(x, w1, b1, w2, b2, bf16_inputs=True)
    ref_f32 = _reference(x, w1, b1, w2, b2, bf16_inputs=False)
    assert jnp.allclose(out, ref_bf, atol=2e-3), float(jnp.max(jnp.abs(out - ref_bf)))
    assert jnp.allclose(out, ref_f32, atol=3e-2), float(jnp.max(jnp.abs(out - ref_f32)))

    # Ragged-batch check: B not a multiple of the tile -> partial (masked) last block.
    B2, TB2 = 300, 128
    x2 = jax.random.normal(kx2, (B2, IN_DIM), jnp.float32)
    out2 = jax.block_until_ready(
        outlier_detection_forward(x2, w1, b1, w2, b2, tile_b=TB2))
    assert out2.shape == (B2, OUT_DIM)
    ref2 = _reference(x2, w1, b1, w2, b2, bf16_inputs=True)
    assert jnp.allclose(out2, ref2, atol=2e-3), float(jnp.max(jnp.abs(out2 - ref2)))

    print("KERNEL_OK")
</pallas_src>

<mosaic_0001>
module attributes {stable_mosaic.version = 11 : i64} {
  func.func @mlp_kernel(%arg0: i32, %arg1: memref<8x768xf32, #tpu.memory_space<vmem>>, %arg2: memref<768x128xbf16, #tpu.memory_space<vmem>>, %arg3: memref<1x128xf32, #tpu.memory_space<vmem>>, %arg4: memref<1x128xf32, #tpu.memory_space<vmem>>, %arg5: memref<1x1xf32, #tpu.memory_space<smem>>, %arg6: memref<8x1xf32, #tpu.memory_space<vmem>>) attributes {dimension_semantics = [#tpu.dimension_semantics<parallel>], iteration_bounds = array<i64: 2>, scalar_prefetch = 0 : i64, scratch_operands = 0 : i64, tpu.core_type = #tpu.core_type<tc>, window_params = [{transform_indices = @transform_0, window_bounds = array<i64: 8, 768>}, {pipeline_mode = #tpu.pipeline_mode<synchronous>, transform_indices = @transform_1, window_bounds = array<i64: 768, 128>}, {pipeline_mode = #tpu.pipeline_mode<synchronous>, transform_indices = @transform_2, window_bounds = array<i64: 1, 128>}, {pipeline_mode = #tpu.pipeline_mode<synchronous>, transform_indices = @transform_3, window_bounds = array<i64: 1, 128>}, {transform_indices = @transform_4, window_bounds = array<i64: 1, 1>}, {transform_indices = @transform_5, window_bounds = array<i64: 8, 1>}]} {
    %c0 = arith.constant 0 : index
    %c0_0 = arith.constant 0 : index
    %0 = vector.load %arg1[%c0, %c0_0] : memref<8x768xf32, #tpu.memory_space<vmem>>, vector<8x768xf32>
    %1 = arith.truncf %0 : vector<8x768xf32> to vector<8x768xbf16>
    %c0_1 = arith.constant 0 : index
    %c0_2 = arith.constant 0 : index
    %2 = vector.load %arg2[%c0_1, %c0_2] : memref<768x128xbf16, #tpu.memory_space<vmem>>, vector<768x128xbf16>
    %cst = arith.constant dense<0.000000e+00> : vector<8x128xf32>
    %3 = tpu.matmul %1, %2, %cst {dimension_numbers = #tpu.dot_dimension_numbers<[1], [0], [0], [1], [0, 0, 1, 1], [], []>} : vector<8x768xbf16>, vector<768x128xbf16>, vector<8x128xf32> -> vector<8x128xf32>
    %c0_3 = arith.constant 0 : index
    %c0_4 = arith.constant 0 : index
    %4 = vector.load %arg3[%c0_3, %c0_4] : memref<1x128xf32, #tpu.memory_space<vmem>>, vector<1x128xf32>
    %5 = vector.broadcast %4 : vector<1x128xf32> to vector<8x128xf32>
    %6 = arith.addf %3, %5 : vector<8x128xf32>
    %cst_5 = arith.constant 0.000000e+00 : f32
    %7 = vector.broadcast %cst_5 : f32 to vector<8x128xf32>
    %8 = arith.maximumf %6, %7 : vector<8x128xf32>
    %c0_6 = arith.constant 0 : index
    %c0_7 = arith.constant 0 : index
    %9 = vector.load %arg4[%c0_6, %c0_7] : memref<1x128xf32, #tpu.memory_space<vmem>>, vector<1x128xf32>
    %10 = vector.broadcast %9 : vector<1x128xf32> to vector<8x128xf32>
    %11 = arith.mulf %8, %10 : vector<8x128xf32>
    %cst_8 = arith.constant dense<0.000000e+00> : vector<8xf32>
    %12 = vector.multi_reduction <add>, %11, %cst_8 [1] : vector<8x128xf32> to vector<8xf32>
    %13 = vector.shape_cast %12 : vector<8xf32> to vector<8x1xf32>
    %c0_9 = arith.constant 0 : index
    %c0_10 = arith.constant 0 : index
    %14 = memref.load %arg5[%c0_9, %c0_10] : memref<1x1xf32, #tpu.memory_space<smem>>
    %15 = vector.broadcast %14 : f32 to vector<8x1xf32>
    %16 = arith.addf %13, %15 : vector<8x1xf32>
    %17 = arith.negf %16 : vector<8x1xf32>
    %18 = math.exp %17 : vector<8x1xf32>
    %cst_11 = arith.constant 1.000000e+00 : f32
    %19 = vector.broadcast %cst_11 : f32 to vector<8x1xf32>
    %20 = arith.addf %19, %18 : vector<8x1xf32>
    %21 = arith.divf %19, %20 : vector<8x1xf32>
    %c0_12 = arith.constant 0 : index
    %c0_13 = arith.constant 0 : index
    %22 = vector.load %arg6[%c0_12, %c0_13] : memref<8x1xf32, #tpu.memory_space<vmem>>, vector<8x1xf32>
    tpu.vector_store %arg6[%c0_12, %c0_13], %21 {strides = array<i32>} : memref<8x1xf32, #tpu.memory_space<vmem>>, vector<8x1xf32>,
    return
  }
  func.func @transform_0(%arg0: i32) -> (i32, i32) {
    %c0_i32 = arith.constant 0 : i32
    %c0_i32_0 = arith.constant 0 : i32
    return %arg0, %c0_i32 : i32, i32
  }
  func.func @transform_1(%arg0: i32) -> (i32, i32) {
    %c0_i32 = arith.constant 0 : i32
    %c0_i32_0 = arith.constant 0 : i32
    %c0_i32_1 = arith.constant 0 : i32
    return %c0_i32, %c0_i32_0 : i32, i32
  }
  func.func @transform_2(%arg0: i32) -> (i32, i32) {
    %c0_i32 = arith.constant 0 : i32
    %c0_i32_0 = arith.constant 0 : i32
    %c0_i32_1 = arith.constant 0 : i32
    return %c0_i32, %c0_i32_0 : i32, i32
  }
  func.func @transform_3(%arg0: i32) -> (i32, i32) {
    %c0_i32 = arith.constant 0 : i32
    %c0_i32_0 = arith.constant 0 : i32
    %c0_i32_1 = arith.constant 0 : i32
    return %c0_i32, %c0_i32_0 : i32, i32
  }
  func.func @transform_4(%arg0: i32) -> (i32, i32) {
    %c0_i32 = arith.constant 0 : i32
    %c0_i32_0 = arith.constant 0 : i32
    %c0_i32_1 = arith.constant 0 : i32
    return %c0_i32, %c0_i32_0 : i32, i32
  }
  func.func @transform_5(%arg0: i32) -> (i32, i32) {
    %c0_i32 = arith.constant 0 : i32
    %c0_i32_0 = arith.constant 0 : i32
    return %arg0, %c0_i32 : i32, i32
  }
}

</mosaic_0001>

<llo_original>
// kernel: tpu_custom_call.1
$region0: #{tpu_custom_call.1}
  #allocation0 [shape = 'u32[]', space=smem, size = 0x4, offset = 0x4, fixed_abs, tag = 'smem constant byte address 0x4 - core index']
  #allocation1 [shape = 'u32[72,128]{1,0:T(1,128)}', space=vmem, size = 0x9000, scoped, tag = 'internal scratch']
  #allocation2 [shape = 'f32[1,1]{1,0:T(1,128)S(6)}', space=smem, size = 0x200, scoped, tag = 'scoped memory for tpu_custom_call.1']
  %s0 = inlined_call_operand.hbm [shape: f32[16,768], index: 0, kind: input, shape index: {}]
  %s1 = inlined_call_operand.hbm [shape: bf16[768,128], index: 1, kind: input, shape index: {}]
  %s2 = inlined_call_operand.vmem [shape: f32[1,128], index: 2, kind: input, shape index: {}]
  %s3 = inlined_call_operand.vmem [shape: f32[1,128], index: 3, kind: input, shape index: {}]
  %s4 = inlined_call_operand.<no memory space> [shape: f32[1,1], index: 4, kind: input, shape index: {}]
  %s5 = inlined_call_operand.vmem [shape: f32[16,1], index: 5, kind: output, shape index: {}]
  %s6 = sld [smem:[#allocation0]]
  $region61: #{tpu_custom_call.1} parent=0
    _
  %s8 = ssub.s32 1, %s6
  %s9 = scalar_select 0, %s8, %s6
  %10 = sst [smem:[#allocation2]] %s4
  $region1: #{tpu_custom_call.1} parent=0
    #allocation3 [shape = 'u8[49152]{0}', space=vmem, size = 0xc000, scoped, tag = 'input window, operand 0']
    #allocation4 [shape = 's32[2]{0}', space=sflag, size = 0x8, scoped, tag = 'scoped memory for tpu_custom_call.1']
    #allocation5 [shape = 'u8[196608]{0}', space=vmem, size = 0x30000, scoped, tag = 'input window, operand 1, single buffered']
    #allocation6 [shape = 's32[1]{0}', space=sflag, size = 0x4, scoped, tag = 'scoped memory for tpu_custom_call.1']
    %11 = vsyncpa [#allocation4], 0
    %s12 = scalar_lea.sflag [#allocation4], 1
    %13 = vsyncpa %s12, 0
    %14 = vsyncpa [#allocation6], 0
    loop: start=0, step=1, limit=4
    $region2: #{tpu_custom_call.1} parent=1 // loop_pre_header
      _
    $region3: #{tpu_custom_call.1} parent=1 // loop_header
      %s16 = sphi 0, %s20
      %p17 = scmp.ge.s32.totalorder %s16, 4
      %s26 = sphi 0, %s28
      %s29 = sphi 0, %s26
      %s30 = sphi 0, %s29
      %s46 = sphi 0, %s30
      %s50 = sphi 0, %s50
      %s52 = sphi 0, %s50
      %s53 = sphi 0, %s52
      %s67 = sphi 0, %s53
      %s71 = sphi 0, %s71
      %s73 = sphi 0, %s71
      %s74 = sphi 0, %s73
      %s88 = sphi 0, %s74
      %s92 = sphi 0, %s92
      %s94 = sphi 0, %s92
      %s95 = sphi 0, %s94
      %s109 = sphi 0, %s95
      %s113 = sphi 0, %s113
      %s115 = sphi 0, %s113
      %s116 = sphi 0, %s115
      %s130 = sphi 0, %s116
      %s136 = sphi 0, %s138
      %s139 = sphi 0, %s136
      %s140 = sphi 0, %s139
      %s156 = sphi 0, %s140
    $region4: #{tpu_custom_call.1} parent=1 // loop_header_branch
      %19 = sbr.rel (%p17) target = $region8
    $region5: #{tpu_custom_call.1} parent=1 // loop_body
      %s21 = ssub.s32 %s16, 1
      %s22 = ssub.s32 %s16, 2
      %s23 = sadd.s32 %s16, 1
      %s24 = ssub.s32 %s16, %s23
      %p25 = scmp.eq.s32.totalorder %s24, 0
      %s27 = sadd.s32 %s26, 1
      %s28 = scalar_select %p25, %s26, %s27
      %p31 = pneg %p25
      %p32 = scmp.eq.s32.totalorder %s16, 1
      %p33 = por %p31, %p32
      %p34 = scmp.ne.s32.totalorder %s26, %s29
      %p35 = scmp.eq.s32.totalorder %s16, 0
      %p36 = por %p34, %p35
      %p37 = scmp.ne.s32.totalorder %s26, %s29
      %p38 = scmp.eq.s32.totalorder %s21, 1
      %p39 = por %p37, %p38
      %p40 = scmp.ne.s32.totalorder %s29, %s30
      %p41 = scmp.eq.s32.totalorder %s21, 0
      %p42 = por %p40, %p41
      %p43 = scmp.ne.s32.totalorder %s29, %s30
      %p44 = scmp.eq.s32.totalorder %s22, 1
      %p45 = por %p43, %p44
      %p47 = scmp.ne.s32.totalorder %s30, %s46
      %p48 = scmp.eq.s32.totalorder %s22, 0
      %p49 = por %p47, %p48
      %s51 = sadd.s32 %s50, 1
      %p54 = scmp.eq.s32.totalorder %s16, 1
      %p55 = scmp.ne.s32.totalorder %s50, %s52
      %p56 = scmp.eq.s32.totalorder %s16, 0
      %p57 = por %p55, %p56
      %p58 = scmp.ne.s32.totalorder %s50, %s52
      %p59 = scmp.eq.s32.totalorder %s21, 1
      %p60 = por %p58, %p59
      %p61 = scmp.ne.s32.totalorder %s52, %s53
      %p62 = scmp.eq.s32.totalorder %s21, 0
      %p63 = por %p61, %p62
      %p64 = scmp.ne.s32.totalorder %s52, %s53
      %p65 = scmp.eq.s32.totalorder %s22, 1
      %p66 = por %p64, %p65
      %p68 = scmp.ne.s32.totalorder %s53, %s67
      %p69 = scmp.eq.s32.totalorder %s22, 0
      %p70 = por %p68, %p69
      %s72 = sadd.s32 %s71, 1
      %p75 = scmp.eq.s32.totalorder %s16, 1
      %p76 = scmp.ne.s32.totalorder %s71, %s73
      %p77 = scmp.eq.s32.totalorder %s16, 0
      %p78 = por %p76, %p77
      %p79 = scmp.ne.s32.totalorder %s71, %s73
      %p80 = scmp.eq.s32.totalorder %s21, 1
      %p81 = por %p79, %p80
      %p82 = scmp.ne.s32.totalorder %s73, %s74
      %p83 = scmp.eq.s32.totalorder %s21, 0
      %p84 = por %p82, %p83
      %p85 = scmp.ne.s32.totalorder %s73, %s74
      %p86 = scmp.eq.s32.totalorder %s22, 1
      %p87 = por %p85, %p86
      %p89 = scmp.ne.s32.totalorder %s74, %s88
      %p90 = scmp.eq.s32.totalorder %s22, 0
      %p91 = por %p89, %p90
      %s93 = sadd.s32 %s92, 1
      %p96 = scmp.eq.s32.totalorder %s16, 1
      %p97 = scmp.ne.s32.totalorder %s92, %s94
      %p98 = scmp.eq.s32.totalorder %s16, 0
      %p99 = por %p97, %p98
      %p100 = scmp.ne.s32.totalorder %s92, %s94
      %p101 = scmp.eq.s32.totalorder %s21, 1
      %p102 = por %p100, %p101
      %p103 = scmp.ne.s32.totalorder %s94, %s95
      %p104 = scmp.eq.s32.totalorder %s21, 0
      %p105 = por %p103, %p104
      %p106 = scmp.ne.s32.totalorder %s94, %s95
      %p107 = scmp.eq.s32.totalorder %s22, 1
      %p108 = por %p106, %p107
      %p110 = scmp.ne.s32.totalorder %s95, %s109
      %p111 = scmp.eq.s32.totalorder %s22, 0
      %p112 = por %p110, %p111
      %s114 = sadd.s32 %s113, 1
      %p117 = scmp.eq.s32.totalorder %s16, 1
      %p118 = scmp.ne.s32.totalorder %s113, %s115
      %p119 = scmp.eq.s32.totalorder %s16, 0
      %p120 = por %p118, %p119
      %p121 = scmp.ne.s32.totalorder %s113, %s115
      %p122 = scmp.eq.s32.totalorder %s21, 1
      %p123 = por %p121, %p122
      %p124 = scmp.ne.s32.totalorder %s115, %s116
      %p125 = scmp.eq.s32.totalorder %s21, 0
      %p126 = por %p124, %p125
      %p127 = scmp.ne.s32.totalorder %s115, %s116
      %p128 = scmp.eq.s32.totalorder %s22, 1
      %p129 = por %p127, %p128
      %p131 = scmp.ne.s32.totalorder %s116, %s130
      %p132 = scmp.eq.s32.totalorder %s22, 0
      %p133 = por %p131, %p132
      %s134 = ssub.s32 %s16, %s23
      %p135 = scmp.eq.s32.totalorder %s134, 0
      %s137 = sadd.s32 %s136, 1
      %s138 = scalar_select %p135, %s136, %s137
      %p141 = pneg %p135
      %p142 = scmp.eq.s32.totalorder %s16, 1
      %p143 = por %p141, %p142
      %p144 = scmp.ne.s32.totalorder %s136, %s139
      %p145 = scmp.eq.s32.totalorder %s16, 0
      %p146 = por %p144, %p145
      %p147 = scmp.ne.s32.totalorder %s136, %s139
      %p148 = scmp.eq.s32.totalorder %s21, 1
      %p149 = por %p147, %p148
      %p150 = scmp.ne.s32.totalorder %s139, %s140
      %p151 = scmp.eq.s32.totalorder %s21, 0
      %p152 = por %p150, %p151
      %p153 = scmp.ne.s32.totalorder %s139, %s140
      %p154 = scmp.eq.s32.totalorder %s22, 1
      %p155 = por %p153, %p154
      %p157 = scmp.ne.s32.totalorder %s140, %s156
      %p158 = scmp.eq.s32.totalorder %s22, 0
      %p159 = por %p157, %p158
      %p160 = scmp.le.s32.totalorder 1, %s16
      %p161 = scmp.lt.s32.totalorder %s16, 3
      %p162 = pnand %p160, %p161
      %p163 = pneg %p162
      // Predicated region
      $region9: #{tpu_custom_call.1} parent=5 // pred_check
        _
      $region10: #{tpu_custom_call.1} parent=5 // pred_check_branch
        %165 = sbr.rel (%p162) target = $region12
      $region11: #{tpu_custom_call.1} parent=5 // pred_region
        %s166 = ssub.s32 %s16, 1
        // Predicated region
        $region13: #{tpu_custom_call.1} parent=11 // pred_check
          %p167 = pneg %p63
        $region14: #{tpu_custom_call.1} parent=11 // pred_check_branch
          %169 = sbr.rel (%p167) target = $region16
        $region15: #{tpu_custom_call.1} parent=11 // pred_region
          %171 = vsyncadd [#allocation6], 0
          %s172 = sshll.u32 %s1, 4
          %s173 = int_to_ptr.hbm [resolvable:$true] %s172
          %s174 = sshll.u32 [#allocation5], 4
          %s175 = int_to_ptr.vmem [resolvable:$true] %s174
          %180 = dma.hbm_to_vmem [thread:$0]  %s173, 6144, %s175, [#allocation6], 64, 64, 4
        $region16: #{tpu_custom_call.1} parent=11 // pred_fallthru
          _
        // Predicated region
        $region17: #{tpu_custom_call.1} parent=11 // pred_check
          %p181 = pneg %p84
        $region18: #{tpu_custom_call.1} parent=11 // pred_check_branch
          %183 = sbr.rel (%p181) target = $region20
        $region19: #{tpu_custom_call.1} parent=11 // pred_region
          _
        $region20: #{tpu_custom_call.1} parent=11 // pred_fallthru
          _
        // Predicated region
        $region21: #{tpu_custom_call.1} parent=11 // pred_check
          %p184 = pneg %p105
        $region22: #{tpu_custom_call.1} parent=11 // pred_check_branch
          %186 = sbr.rel (%p184) target = $region24
        $region23: #{tpu_custom_call.1} parent=11 // pred_region
          _
        $region24: #{tpu_custom_call.1} parent=11 // pred_fallthru
          _
        // Predicated region
        $region25: #{tpu_custom_call.1} parent=11 // pred_check
          %p187 = pneg %p126
        $region26: #{tpu_custom_call.1} parent=11 // pred_check_branch
          %189 = sbr.rel (%p187) target = $region28
        $region27: #{tpu_custom_call.1} parent=11 // pred_region
          _
        $region28: #{tpu_custom_call.1} parent=11 // pred_fallthru
          _
      $region12: #{tpu_custom_call.1} parent=5 // pred_fallthru
        _
      %p190 = scmp.lt.s32.totalorder %s16, 2
      // Predicated region
      $region29: #{tpu_custom_call.1} parent=5 // pred_check
        %p191 = pneg %p190
      $region30: #{tpu_custom_call.1} parent=5 // pred_check_branch
        %193 = sbr.rel (%p191) target = $region32
      $region31: #{tpu_custom_call.1} parent=5 // pred_region
        // Predicated region
        $region33: #{tpu_custom_call.1} parent=31 // pred_check
          %p194 = pneg %p36
        $region34: #{tpu_custom_call.1} parent=31 // pred_check_branch
          %196 = sbr.rel (%p194) target = $region36
        $region35: #{tpu_custom_call.1} parent=31 // pred_region
          %s197 = sand.u32 %s26, 1
          %s198 = scalar_lea.sflag [#allocation4], %s197
          %s199 = sand.u32 %s26, 1
          %s200 = smul.addr %s199, 48
          %s201 = scalar_lea.vmem [#allocation3], %s200
          %203 = vsyncadd %s198, 0
          %s204 = smul.addr %s16, 6
          %s205 = smul.addr %s204, 8
          %s206 = scalar_lea.hbm %s0, %s205
          %s208 = sshll.u32 %s206, 4
          %s209 = int_to_ptr.hbm [resolvable:$true] %s208
          %s210 = sshll.u32 %s201, 4
          %s211 = int_to_ptr.vmem [resolvable:$true] %s210
          %213 = dma.hbm_to_vmem [thread:$0]  %s209, 768, %s211, %s198
        $region36: #{tpu_custom_call.1} parent=31 // pred_fallthru
          _
      $region32: #{tpu_custom_call.1} parent=5 // pred_fallthru
        _
      %p214 = scmp.le.s32.totalorder 1, %s16
      %p215 = scmp.lt.s32.totalorder %s16, 3
      %p216 = pnand %p214, %p215
      %p217 = pneg %p216
      // Predicated region
      $region37: #{tpu_custom_call.1} parent=5 // pred_check
        _
      $region38: #{tpu_custom_call.1} parent=5 // pred_check_branch
        %219 = sbr.rel (%p216) target = $region40
      $region39: #{tpu_custom_call.1} parent=5 // pred_region
        %s220 = ssub.s32 %s16, 1
        %s221 = sand.u32 %s29, 1
        %s222 = scalar_lea.sflag [#allocation4], %s221
        %s223 = sand.u32 %s29, 1
        %s224 = smul.addr %s223, 48
        %s225 = scalar_lea.vmem [#allocation3], %s224
        // Predicated region
        $region41: #{tpu_custom_call.1} parent=39 // pred_check
          %p226 = pneg %p42
        $region42: #{tpu_custom_call.1} parent=39 // pred_check_branch
          %228 = sbr.rel (%p226) target = $region44
        $region43: #{tpu_custom_call.1} parent=39 // pred_region
          %230 = dma.done %s222, 768
        $region44: #{tpu_custom_call.1} parent=39 // pred_fallthru
          _
        // Predicated region
        $region45: #{tpu_custom_call.1} parent=39 // pred_check
          %p231 = pneg %p63
        $region46: #{tpu_custom_call.1} parent=39 // pred_check_branch
          %233 = sbr.rel (%p231) target = $region48
        $region47: #{tpu_custom_call.1} parent=39 // pred_region
          %235 = dma.done [#allocation6], 6144
        $region48: #{tpu_custom_call.1} parent=39 // pred_fallthru
          _
        %s236 = sand.u32 %s29, 1
        %s237 = scalar_lea.sflag [#allocation4], %s236
        %s238 = sand.u32 %s29, 1
        %s239 = smul.addr %s238, 48
        %s240 = scalar_lea.vmem [#allocation3], %s239
        %p241 = pneg %p42
        %p242 = pneg %p39
        %p243 = pneg %p63
        %p244 = pneg %p60
        %p245 = pneg %p84
        %p246 = pneg %p81
        %p247 = pneg %p105
        %p248 = pneg %p102
        %p249 = pneg %p126
        %p250 = pneg %p123
        %p251 = pneg %p152
        %p252 = pneg %p149
        %p253 = scmp.lt.s32.totalorder %s21, 1
        %s254 = scalar_select %p253, %s21, 1
        %s255 = smul.addr %s254, 8
        %s256 = scalar_lea.vmem %s5, %s255
        %p257 = scmp.lt.s32.totalorder %s21, 1
        %s258 = scalar_select %p257, %s21, 1
        %s259 = smul.addr %s258, 8
        %s260 = scalar_lea.vmem %s5, %s259
        %v261 = vld [vmem:[%s225] sm:$0xff]
        %v262 = vld [vmem:[%s225 + $0x8] sm:$0xff]
        %v263 = vld [vmem:[%s225 + $0x10] sm:$0xff]
        %v264 = vld [vmem:[%s225 + $0x18] sm:$0xff]
        %v265 = vld [vmem:[%s225 + $0x20] sm:$0xff]
        %v266 = vld [vmem:[%s225 + $0x28] sm:$0xff]
        %v267 = vpack.c.bf16 %v261, %v261
        %v268 = vpack.c.bf16 %v262, %v262
        %v269 = vpack.c.bf16 %v263, %v263
        %v270 = vpack.c.bf16 %v264, %v264
        %v271 = vpack.c.bf16 %v265, %v265
        %v272 = vpack.c.bf16 %v266, %v266
        %v273 = vld [vmem:[#allocation5] sm:$0xf]
        %v274 = vld [vmem:[#allocation5 + $0x4] sm:$0xf]
        %v275 = vld [vmem:[#allocation5 + $0x8] sm:$0xf]
        %v276 = vld [vmem:[#allocation5 + $0xc] sm:$0xf]
        %v277 = vld [vmem:[#allocation5 + $0x10] sm:$0xf]
        %v278 = vld [vmem:[#allocation5 + $0x14] sm:$0xf]
        %v279 = vld [vmem:[#allocation5 + $0x18] sm:$0xf]
        %v280 = vld [vmem:[#allocation5 + $0x1c] sm:$0xf]
        %v281 = vld [vmem:[#allocation5 + $0x20] sm:$0xf]
        %v282 = vld [vmem:[#allocation5 + $0x24] sm:$0xf]
        %v283 = vld [vmem:[#allocation5 + $0x28] sm:$0xf]
        %v284 = vld [vmem:[#allocation5 + $0x2c] sm:$0xf]
        %v285 = vld [vmem:[#allocation5 + $0x30] sm:$0xf]
        %v286 = vld [vmem:[#allocation5 + $0x34] sm:$0xf]
        %v287 = vld [vmem:[#allocation5 + $0x38] sm:$0xf]
        %v288 = vld [vmem:[#allocation5 + $0x3c] sm:$0xf]
        %v289 = vld [vmem:[#allocation5 + $0x40] sm:$0xf]
        %v290 = vld [vmem:[#allocation5 + $0x44] sm:$0xf]
        %v291 = vld [vmem:[#allocation5 + $0x48] sm:$0xf]
        %v292 = vld [vmem:[#allocation5 + $0x4c] sm:$0xf]
        %v293 = vld [vmem:[#allocation5 + $0x50] sm:$0xf]
        %v294 = vld [vmem:[#allocation5 + $0x54] sm:$0xf]
        %v295 = vld [vmem:[#allocation5 + $0x58] sm:$0xf]
        %v296 = vld [vmem:[#allocation5 + $0x5c] sm:$0xf]
        %v297 = vld [vmem:[#allocation5 + $0x60] sm:$0xf]
        %v298 = vld [vmem:[#allocation5 + $0x64] sm:$0xf]
        %v299 = vld [vmem:[#allocation5 + $0x68] sm:$0xf]
        %v300 = vld [vmem:[#allocation5 + $0x6c] sm:$0xf]
        %v301 = vld [vmem:[#allocation5 + $0x70] sm:$0xf]
        %v302 = vld [vmem:[#allocation5 + $0x74] sm:$0xf]
        %v303 = vld [vmem:[#allocation5 + $0x78] sm:$0xf]
        %v304 = vld [vmem:[#allocation5 + $0x7c] sm:$0xf]
        %v305 = vld [vmem:[#allocation5 + $0x80] sm:$0xf]
        %v306 = vld [vmem:[#allocation5 + $0x84] sm:$0xf]
        %v307 = vld [vmem:[#allocation5 + $0x88] sm:$0xf]
        %v308 = vld [vmem:[#allocation5 + $0x8c] sm:$0xf]
        %v309 = vld [vmem:[#allocation5 + $0x90] sm:$0xf]
        %v310 = vld [vmem:[#allocation5 + $0x94] sm:$0xf]
        %v311 = vld [vmem:[#allocation5 + $0x98] sm:$0xf]
        %v312 = vld [vmem:[#allocation5 + $0x9c] sm:$0xf]
        %v313 = vld [vmem:[#allocation5 + $0xa0] sm:$0xf]
        %v314 = vld [vmem:[#allocation5 + $0xa4] sm:$0xf]
        %v315 = vld [vmem:[#allocation5 + $0xa8] sm:$0xf]
        %v316 = vld [vmem:[#allocation5 + $0xac] sm:$0xf]
        %v317 = vld [vmem:[#allocation5 + $0xb0] sm:$0xf]
        %v318 = vld [vmem:[#allocation5 + $0xb4] sm:$0xf]
        %v319 = vld [vmem:[#allocation5 + $0xb8] sm:$0xf]
        %v320 = vld [vmem:[#allocation5 + $0xbc] sm:$0xf]
        %v321 = vld [vmem:[#allocation5 + $0xc0] sm:$0xf]
        %v322 = vld [vmem:[#allocation5 + $0xc4] sm:$0xf]
        %v323 = vld [vmem:[#allocation5 + $0xc8] sm:$0xf]
        %v324 = vld [vmem:[#allocation5 + $0xcc] sm:$0xf]
        %v325 = vld [vmem:[#allocation5 + $0xd0] sm:$0xf]
        %v326 = vld [vmem:[#allocation5 + $0xd4] sm:$0xf]
        %v327 = vld [vmem:[#allocation5 + $0xd8] sm:$0xf]
        %v328 = vld [vmem:[#allocation5 + $0xdc] sm:$0xf]
        %v329 = vld [vmem:[#allocation5 + $0xe0] sm:$0xf]
        %v330 = vld [vmem:[#allocation5 + $0xe4] sm:$0xf]
        %v331 = vld [vmem:[#allocation5 + $0xe8] sm:$0xf]
        %v332 = vld [vmem:[#allocation5 + $0xec] sm:$0xf]
        %v333 = vld [vmem:[#allocation5 + $0xf0] sm:$0xf]
        %v334 = vld [vmem:[#allocation5 + $0xf4] sm:$0xf]
        %v335 = vld [vmem:[#allocation5 + $0xf8] sm:$0xf]
        %v336 = vld [vmem:[#allocation5 + $0xfc] sm:$0xf]
        %v337 = vld [vmem:[#allocation5 + $0x100] sm:$0xf]
        %v338 = vld [vmem:[#allocation5 + $0x104] sm:$0xf]
        %v339 = vld [vmem:[#allocation5 + $0x108] sm:$0xf]
        %v340 = vld [vmem:[#allocation5 + $0x10c] sm:$0xf]
        %v341 = vld [vmem:[#allocation5 + $0x110] sm:$0xf]
        %v342 = vld [vmem:[#allocation5 + $0x114] sm:$0xf]
        %v343 = vld [vmem:[#allocation5 + $0x118] sm:$0xf]
        %v344 = vld [vmem:[#allocation5 + $0x11c] sm:$0xf]
        %v345 = vld [vmem:[#allocation5 + $0x120] sm:$0xf]
        %v346 = vld [vmem:[#allocation5 + $0x124] sm:$0xf]
        %v347 = vld [vmem:[#allocation5 + $0x128] sm:$0xf]
        %v348 = vld [vmem:[#allocation5 + $0x12c] sm:$0xf]
        %v349 = vld [vmem:[#allocation5 + $0x130] sm:$0xf]
        %v350 = vld [vmem:[#allocation5 + $0x134] sm:$0xf]
        %v351 = vld [vmem:[#allocation5 + $0x138] sm:$0xf]
        %v352 = vld [vmem:[#allocation5 + $0x13c] sm:$0xf]
        %v353 = vld [vmem:[#allocation5 + $0x140] sm:$0xf]
        %v354 = vld [vmem:[#allocation5 + $0x144] sm:$0xf]
        %v355 = vld [vmem:[#allocation5 + $0x148] sm:$0xf]
        %v356 = vld [vmem:[#allocation5 + $0x14c] sm:$0xf]
        %v357 = vld [vmem:[#allocation5 + $0x150] sm:$0xf]
        %v358 = vld [vmem:[#allocation5 + $0x154] sm:$0xf]
        %v359 = vld [vmem:[#allocation5 + $0x158] sm:$0xf]
        %v360 = vld [vmem:[#allocation5 + $0x15c] sm:$0xf]
        %v361 = vld [vmem:[#allocation5 + $0x160] sm:$0xf]
        %v362 = vld [vmem:[#allocation5 + $0x164] sm:$0xf]
        %v363 = vld [vmem:[#allocation5 + $0x168] sm:$0xf]
        %v364 = vld [vmem:[#allocation5 + $0x16c] sm:$0xf]
        %v365 = vld [vmem:[#allocation5 + $0x170] sm:$0xf]
        %v366 = vld [vmem:[#allocation5 + $0x174] sm:$0xf]
        %v367 = vld [vmem:[#allocation5 + $0x178] sm:$0xf]
        %v368 = vld [vmem:[#allocation5 + $0x17c] sm:$0xf]
        %v369 = vld [vmem:[%s2] sm:$0x1]
        %v371 = vperm.slane %v369, 0
        %v469 = vunpack.c.l.b16 %v273
        %v470 = vunpack.c.l.b16 %v274
        %v471 = vunpack.c.l.b16 %v275
        %v472 = vunpack.c.l.b16 %v276
        %v473 = vunpack.c.l.b16 %v277
        %v474 = vunpack.c.l.b16 %v278
        %v475 = vunpack.c.l.b16 %v279
        %v476 = vunpack.c.l.b16 %v280
        %v477 = vunpack.c.l.b16 %v281
        %v478 = vunpack.c.l.b16 %v282
        %v479 = vunpack.c.l.b16 %v283
        %v480 = vunpack.c.l.b16 %v284
        %v481 = vunpack.c.l.b16 %v285
        %v482 = vunpack.c.l.b16 %v286
        %v483 = vunpack.c.l.b16 %v287
        %v484 = vunpack.c.l.b16 %v288
        %v485 = vunpack.c.l.b16 %v289
        %v486 = vunpack.c.l.b16 %v290
        %v487 = vunpack.c.l.b16 %v291
        %v488 = vunpack.c.l.b16 %v292
        %v489 = vunpack.c.l.b16 %v293
        %v490 = vunpack.c.l.b16 %v294
        %v491 = vunpack.c.l.b16 %v295
        %v492 = vunpack.c.l.b16 %v296
        %v493 = vunpack.c.l.b16 %v297
        %v494 = vunpack.c.l.b16 %v298
        %v495 = vunpack.c.l.b16 %v299
        %v496 = vunpack.c.l.b16 %v300
        %v497 = vunpack.c.l.b16 %v301
        %v498 = vunpack.c.l.b16 %v302
        %v499 = vunpack.c.l.b16 %v303
        %v500 = vunpack.c.l.b16 %v304
        %v501 = vunpack.c.l.b16 %v305
        %v502 = vunpack.c.l.b16 %v306
        %v503 = vunpack.c.l.b16 %v307
        %v504 = vunpack.c.l.b16 %v308
        %v505 = vunpack.c.l.b16 %v309
        %v506 = vunpack.c.l.b16 %v310
        %v507 = vunpack.c.l.b16 %v311
        %v508 = vunpack.c.l.b16 %v312
        %v509 = vunpack.c.l.b16 %v313
        %v510 = vunpack.c.l.b16 %v314
        %v511 = vunpack.c.l.b16 %v315
        %v512 = vunpack.c.l.b16 %v316
        %v513 = vunpack.c.l.b16 %v317
        %v514 = vunpack.c.l.b16 %v318
        %v515 = vunpack.c.l.b16 %v319
        %v516 = vunpack.c.l.b16 %v320
        %v517 = vunpack.c.l.b16 %v321
        %v518 = vunpack.c.l.b16 %v322
        %v519 = vunpack.c.l.b16 %v323
        %v520 = vunpack.c.l.b16 %v324
        %v521 = vunpack.c.l.b16 %v325
        %v522 = vunpack.c.l.b16 %v326
        %v523 = vunpack.c.l.b16 %v327
        %v524 = vunpack.c.l.b16 %v328
        %v525 = vunpack.c.l.b16 %v329
        %v526 = vunpack.c.l.b16 %v330
        %v527 = vunpack.c.l.b16 %v331
        %v528 = vunpack.c.l.b16 %v332
        %v529 = vunpack.c.l.b16 %v333
        %v530 = vunpack.c.l.b16 %v334
        %v531 = vunpack.c.l.b16 %v335
        %v532 = vunpack.c.l.b16 %v336
        %v533 = vunpack.c.l.b16 %v337
        %v534 = vunpack.c.l.b16 %v338
        %v535 = vunpack.c.l.b16 %v339
        %v536 = vunpack.c.l.b16 %v340
        %v537 = vunpack.c.l.b16 %v341
        %v538 = vunpack.c.l.b16 %v342
        %v539 = vunpack.c.l.b16 %v343
        %v540 = vunpack.c.l.b16 %v344
        %v541 = vunpack.c.l.b16 %v345
        %v542 = vunpack.c.l.b16 %v346
        %v543 = vunpack.c.l.b16 %v347
        %v544 = vunpack.c.l.b16 %v348
        %v545 = vunpack.c.l.b16 %v349
        %v546 = vunpack.c.l.b16 %v350
        %v547 = vunpack.c.l.b16 %v351
        %v548 = vunpack.c.l.b16 %v352
        %v549 = vunpack.c.l.b16 %v353
        %v550 = vunpack.c.l.b16 %v354
        %v551 = vunpack.c.l.b16 %v355
        %v552 = vunpack.c.l.b16 %v356
        %v553 = vunpack.c.l.b16 %v357
        %v554 = vunpack.c.l.b16 %v358
        %v555 = vunpack.c.l.b16 %v359
        %v556 = vunpack.c.l.b16 %v360
        %v557 = vunpack.c.l.b16 %v361
        %v558 = vunpack.c.l.b16 %v362
        %v559 = vunpack.c.l.b16 %v363
        %v560 = vunpack.c.l.b16 %v364
        %v561 = vunpack.c.l.b16 %v365
        %v562 = vunpack.c.l.b16 %v366
        %v563 = vunpack.c.l.b16 %v367
        %v564 = vunpack.c.l.b16 %v368
        %v565 = vpack.c.b16 %v470, %v469
        %v566 = vpack.c.b16 %v472, %v471
        %v567 = vpack.c.b16 %v474, %v473
        %v568 = vpack.c.b16 %v476, %v475
        %v569 = vpack.c.b16 %v478, %v477
        %v570 = vpack.c.b16 %v480, %v479
        %v571 = vpack.c.b16 %v482, %v481
        %v572 = vpack.c.b16 %v484, %v483
        %v573 = vpack.c.b16 %v486, %v485
        %v574 = vpack.c.b16 %v488, %v487
        %v575 = vpack.c.b16 %v490, %v489
        %v576 = vpack.c.b16 %v492, %v491
        %v577 = vpack.c.b16 %v494, %v493
        %v578 = vpack.c.b16 %v496, %v495
        %v579 = vpack.c.b16 %v498, %v497
        %v580 = vpack.c.b16 %v500, %v499
        %v581 = vpack.c.b16 %v502, %v501
        %v582 = vpack.c.b16 %v504, %v503
        %v583 = vpack.c.b16 %v506, %v505
        %v584 = vpack.c.b16 %v508, %v507
        %v585 = vpack.c.b16 %v510, %v509
        %v586 = vpack.c.b16 %v512, %v511
        %v587 = vpack.c.b16 %v514, %v513
        %v588 = vpack.c.b16 %v516, %v515
        %v589 = vpack.c.b16 %v518, %v517
        %v590 = vpack.c.b16 %v520, %v519
        %v591 = vpack.c.b16 %v522, %v521
        %v592 = vpack.c.b16 %v524, %v523
        %v593 = vpack.c.b16 %v526, %v525
        %v594 = vpack.c.b16 %v528, %v527
        %v595 = vpack.c.b16 %v530, %v529
        %v596 = vpack.c.b16 %v532, %v531
        %v597 = vpack.c.b16 %v534, %v533
        %v598 = vpack.c.b16 %v536, %v535
        %v599 = vpack.c.b16 %v538, %v537
        %v600 = vpack.c.b16 %v540, %v539
        %v601 = vpack.c.b16 %v542, %v541
        %v602 = vpack.c.b16 %v544, %v543
        %v603 = vpack.c.b16 %v546, %v545
        %v604 = vpack.c.b16 %v548, %v547
        %v605 = vpack.c.b16 %v550, %v549
        %v606 = vpack.c.b16 %v552, %v551
        %v607 = vpack.c.b16 %v554, %v553
        %v608 = vpack.c.b16 %v556, %v555
        %v609 = vpack.c.b16 %v558, %v557
        %v610 = vpack.c.b16 %v560, %v559
        %v611 = vpack.c.b16 %v562, %v561
        %v612 = vpack.c.b16 %v564, %v563
        %661 = vmatpush.bf16.msra.mxu0 %v572
        %662 = vmatpush.bf16.msra.mxu0 %v571
        %663 = vmatpush.bf16.msra.mxu0 %v570
        %664 = vmatpush.bf16.msra.mxu0 %v569
        %665 = vmatpush.bf16.msra.mxu0 %v568
        %666 = vmatpush.bf16.msra.mxu0 %v567
        %667 = vmatpush.bf16.msra.mxu0 %v566
        %668 = vmatpush.bf16.msra.mxu0 %v565
        %669 = vmatmul.bf16.gmra.mxu0 %v267
        %v670 = vpop.f32.mrf.mxu0
        %v671 = vadd.f32 %v371, %v670
        %v672 = vpop.f32.mrf.mxu0
        %673 = vdwg.mxu0
        %674 = vmatpush.bf16.msra.mxu0 %v580
        %675 = vmatpush.bf16.msra.mxu0 %v579
        %676 = vmatpush.bf16.msra.mxu0 %v578
        %677 = vmatpush.bf16.msra.mxu0 %v577
        %678 = vmatpush.bf16.msra.mxu0 %v576
        %679 = vmatpush.bf16.msra.mxu0 %v575
        %680 = vmatpush.bf16.msra.mxu0 %v574
        %681 = vmatpush.bf16.msra.mxu0 %v573
        %682 = vmatmul.bf16.gmra.mxu0 %v268
        %v683 = vpop.f32.mrf.mxu0
        %v684 = vadd.f32 %v671, %v683
        %v685 = vpop.f32.mrf.mxu0
        %686 = vdwg.mxu0
        %687 = vmatpush.bf16.msra.mxu0 %v588
        %688 = vmatpush.bf16.msra.mxu0 %v587
        %689 = vmatpush.bf16.msra.mxu0 %v586
        %690 = vmatpush.bf16.msra.mxu0 %v585
        %691 = vmatpush.bf16.msra.mxu0 %v584
        %692 = vmatpush.bf16.msra.mxu0 %v583
        %693 = vmatpush.bf16.msra.mxu0 %v582
        %694 = vmatpush.bf16.msra.mxu0 %v581
        %695 = vmatmul.bf16.gmra.mxu0 %v269
        %v696 = vpop.f32.mrf.mxu0
        %v697 = vadd.f32 %v684, %v696
        %v698 = vpop.f32.mrf.mxu0
        %699 = vdwg.mxu0
        %700 = vmatpush.bf16.msra.mxu0 %v596
        %701 = vmatpush.bf16.msra.mxu0 %v595
        %702 = vmatpush.bf16.msra.mxu0 %v594
        %703 = vmatpush.bf16.msra.mxu0 %v593
        %704 = vmatpush.bf16.msra.mxu0 %v592
        %705 = vmatpush.bf16.msra.mxu0 %v591
        %706 = vmatpush.bf16.msra.mxu0 %v590
        %707 = vmatpush.bf16.msra.mxu0 %v589
        %708 = vmatmul.bf16.gmra.mxu0 %v270
        %v709 = vpop.f32.mrf.mxu0
        %v710 = vadd.f32 %v697, %v709
        %v711 = vpop.f32.mrf.mxu0
        %712 = vdwg.mxu0
        %713 = vmatpush.bf16.msra.mxu0 %v604
        %714 = vmatpush.bf16.msra.mxu0 %v603
        %715 = vmatpush.bf16.msra.mxu0 %v602
        %716 = vmatpush.bf16.msra.mxu0 %v601
        %717 = vmatpush.bf16.msra.mxu0 %v600
        %718 = vmatpush.bf16.msra.mxu0 %v599
        %719 = vmatpush.bf16.msra.mxu0 %v598
        %720 = vmatpush.bf16.msra.mxu0 %v597
        %721 = vmatmul.bf16.gmra.mxu0 %v271
        %v722 = vpop.f32.mrf.mxu0
        %v723 = vadd.f32 %v710, %v722
        %v724 = vpop.f32.mrf.mxu0
        %725 = vdwg.mxu0
        %726 = vmatpush.bf16.msra.mxu0 %v612
        %727 = vmatpush.bf16.msra.mxu0 %v611
        %728 = vmatpush.bf16.msra.mxu0 %v610
        %729 = vmatpush.bf16.msra.mxu0 %v609
        %730 = vmatpush.bf16.msra.mxu0 %v608
        %731 = vmatpush.bf16.msra.mxu0 %v607
        %732 = vmatpush.bf16.msra.mxu0 %v606
        %733 = vmatpush.bf16.msra.mxu0 %v605
        %734 = vmatmul.bf16.gmra.mxu0 %v272
        %v735 = vpop.f32.mrf.mxu0
        %v736 = vadd.f32 %v723, %v735
        %v737 = vpop.f32.mrf.mxu0
        %738 = vdwg.mxu0
        %v739 = vmax.f32 %v736, 0.0
        %v740 = vld [vmem:[%s3] sm:$0x1]
        %v742 = vperm.slane %v740, 0
        %v744 = vmul.f32 %v739, %v742
        %745 = vadd.xlane.f32.xlu0 %v744
        %v746 = vpop.xlane.xlu0 %745
        %s747 = sld [smem:[#allocation2]]
        %v748 = vstv %s747
        %v749 = vadd.f32 %v746, %v748
        %v750 = vxor.u32 %v749, 2147483648
        %v751 = vmul.f32 %v750, 1.442695
        %v752 = vpow.pop %v751
        %v753 = vadd.f32 %v752, 1.0
        %v754 = vrcp.pop %v753
        %v755 = vmul.f32 %v753, %v754
        %v756 = vsub.f32 1.0, %v755
        %v757 = vmul.f32 %v754, %v756
        %v758 = vadd.f32 %v754, %v757
        %vm759 = vweird.f32 %v753
        %vm760 = vweird.f32 %v754
        %vm761 = vmor %vm759, %vm760
        %v762 = vsel %vm761, %v754, %v758
        %v763 = vand.u32 2147483647, %v753
        %vm764 = vcmp.eq.f32.partialorder %v763, 8.507059e+37
        %v765 = vand.u32 %v753, 2147483648
        %v766 = vor.u32 1.1754944e-38, %v765
        %v767 = vsel %vm764, %v766, %v762
        %v768 = vmul.f32 1.0, %v767
        %vm769 = vcmask 7168
        %770 = vst.msk [vmem:[%s260] sm:$0xff] %vm769, %v768
        %p771 = scmp.lt.s32.totalorder %s21, 1
        %s772 = scalar_select %p771, %s21, 1
        %s773 = smul.addr %s772, 8
        %s774 = scalar_lea.vmem %s5, %s773
        // Predicated region
        $region49: #{tpu_custom_call.1} parent=39 // pred_check
          %p775 = pneg %p149
        $region50: #{tpu_custom_call.1} parent=39 // pred_check_branch
          %777 = sbr.rel (%p775) target = $region52
        $region51: #{tpu_custom_call.1} parent=39 // pred_region
          _
        $region52: #{tpu_custom_call.1} parent=39 // pred_fallthru
          _
      $region40: #{tpu_custom_call.1} parent=5 // pred_fallthru
        _
      %p778 = scmp.le.s32.totalorder 2, %s16
      // Predicated region
      $region53: #{tpu_custom_call.1} parent=5 // pred_check
        %p779 = pneg %p778
      $region54: #{tpu_custom_call.1} parent=5 // pred_check_branch
        %781 = sbr.rel (%p779) target = $region56
      $region55: #{tpu_custom_call.1} parent=5 // pred_region
        %s782 = ssub.s32 %s16, 2
        // Predicated region
        $region57: #{tpu_custom_call.1} parent=55 // pred_check
          %p783 = pneg %p155
        $region58: #{tpu_custom_call.1} parent=55 // pred_check_branch
          %785 = sbr.rel (%p783) target = $region60
        $region59: #{tpu_custom_call.1} parent=55 // pred_region
          %p786 = scmp.lt.s32.totalorder %s22, 1
          %s787 = scalar_select %p786, %s22, 1
          %s788 = smul.addr %s787, 8
          %s789 = scalar_lea.vmem %s5, %s788
        $region60: #{tpu_custom_call.1} parent=55 // pred_fallthru
          _
      $region56: #{tpu_custom_call.1} parent=5 // pred_fallthru
        _
    $region6: #{tpu_custom_call.1} parent=1 // loop_footer
      %s20 = sadd.s32 1, %s16
    $region7: #{tpu_custom_call.1} parent=1 // loop_footer_branch
      %15 = sbr.rel target = $region3
    $region8: #{tpu_custom_call.1} parent=1 // loop_exit
      _
    %790 = vsyncpa [#allocation4], 1
    %s791 = scalar_lea.sflag [#allocation4], 1
    %792 = vsyncpa %s791, 1
    %793 = vsyncpa [#allocation6], 1

</llo_original>
